<compile_context>
chip_gen: v6e
topology: v6e:2x2x1
jax: 0.10.0
libtpu: 0.0.40
codegen_flags: <defaults>
</compile_context>

<pallas_src>
import functools

import jax
import jax.numpy as jnp
from jax.experimental import pallas as pl
from jax.experimental.pallas import tpu as pltpu


def _round_up(x: int, m: int) -> int:
    return ((x + m - 1) // m) * m


# ----------------------------------------------------------------------------
# Pallas kernels: tiled dense  out = x @ W + b   (drop=False path)
# ----------------------------------------------------------------------------
def _dense_kernel_multi_k(x_ref, w_ref, b_ref, o_ref, acc_ref):
    """K split over the last grid axis; f32 VMEM accumulator; bias added once."""
    k = pl.program_id(2)

    @pl.when(k == 0)
    def _zero_acc():
        acc_ref[...] = jnp.zeros_like(acc_ref)

    # bf16 x bf16 on the MXU, f32 accumulation.
    acc_ref[...] += jnp.dot(
        x_ref[...], w_ref[...], preferred_element_type=jnp.float32
    )

    @pl.when(k == pl.num_programs(2) - 1)
    def _finalize():
        o_ref[...] = (acc_ref[...] + b_ref[...]).astype(o_ref.dtype)


def _dense_kernel_single_k(x_ref, w_ref, b_ref, o_ref):
    """Fast path: whole K fits one block -> no scratch round trip, no phases."""
    acc = jnp.dot(x_ref[...], w_ref[...], preferred_element_type=jnp.float32)
    o_ref[...] = (acc + b_ref[...]).astype(o_ref.dtype)


# ----------------------------------------------------------------------------
# Forward helper (weights/bias arrive pre-padded + pre-cast from __init__)
# ----------------------------------------------------------------------------
@functools.partial(
    jax.jit, static_argnames=("n_valid", "tm", "tn", "tk", "out_dtype")
)
def _dense_forward(x2d, w_pad, b_pad, *, n_valid, tm, tn, tk, out_dtype):
    """x2d: [M, K] (any float dtype), w_pad: [Kp, Np] bf16, b_pad: [1, Np] f32."""
    M, K = x2d.shape
    Kp, Np = w_pad.shape

    # bf16 activations -> full MXU rate + half the HBM traffic for x.
    x = x2d.astype(jnp.bfloat16)
    # Only the K (reduction) axis needs zero-padding; W's padded K rows are 0.
    if Kp != K:
        x = jnp.pad(x, ((0, 0), (0, Kp - K)))

    # bf16 packs 16 sublanes per vreg: clamp tm to a multiple of 16 for tiny M.
    tm = min(tm, _round_up(M, 16))

    grid_m = pl.cdiv(M, tm)       # no M padding: edge block is masked on store
    grid_n = Np // tn
    grid_k = Kp // tk

    if grid_k == 1:
        kernel = _dense_kernel_single_k
        scratch = []
    else:
        kernel = _dense_kernel_multi_k
        scratch = [pltpu.VMEM((tm, tn), jnp.float32)]

    out = pl.pallas_call(
        kernel,
        out_shape=jax.ShapeDtypeStruct((M, Np), out_dtype),
        grid_spec=pltpu.PrefetchScalarGridSpec(
            num_scalar_prefetch=0,
            grid=(grid_m, grid_n, grid_k),      # reduction (K) axis last
            in_specs=[
                pl.BlockSpec((tm, tk), lambda i, j, k: (i, k)),
                pl.BlockSpec((tk, tn), lambda i, j, k: (k, j)),
                pl.BlockSpec((1, tn), lambda i, j, k: (0, j)),
            ],
            out_specs=pl.BlockSpec((tm, tn), lambda i, j, k: (i, j)),
            scratch_shapes=scratch,
        ),
        compiler_params=pltpu.CompilerParams(
            # (M//tm)*(Np//tn) parallel blocks shard across TensorCores on v7x.
            dimension_semantics=("parallel", "parallel", "arbitrary"),
            vmem_limit_bytes=48 * 1024 * 1024,  # safe headroom under v7x 64 MiB
        ),
    )(x, w_pad, b_pad)

    if Np != n_valid:
        out = out[:, :n_valid]
    return out


# ----------------------------------------------------------------------------
# Module wrapper
# ----------------------------------------------------------------------------
class PruneLayerPallas:
    """JAX/Pallas mirror of PruneLayer: drop -> identity, else wrapped dense layer."""

    def __init__(self, weight, bias, is_last: bool, drop: bool = False,
                 *, tm: int = 512, tn: int = 1024, tk: int = 1024):
        self.drop = bool(drop)
        self.is_last = bool(is_last)

        K, N = weight.shape
        self.n_valid = N
        # Tile sizes clamped to the lane-padded problem size.
        self.tm = tm
        self.tk = min(tk, _round_up(K, 128))
        self.tn = min(tn, _round_up(N, 128))

        Kp = _round_up(K, self.tk)
        Np = _round_up(N, self.tn)

        # Pad + cast ONCE here, not on every forward (weights can be tens of MiB).
        w = jnp.asarray(weight)
        if (Kp, Np) != (K, N):
            w = jnp.pad(w, ((0, Kp - K), (0, Np - N)))
        self.weight = w.astype(jnp.bfloat16)        # [Kp, Np] bf16

        b = jnp.asarray(bias, dtype=jnp.float32)    # bias stays f32 (added to f32 acc)
        if Np != N:
            b = jnp.pad(b, ((0, 0), (0, Np - N)))
        self.bias = b                               # [1, Np] f32

    def __call__(self, hidden_states):
        if self.drop:
            # Pure pass-through: no HBM traffic, exactly like the PyTorch module.
            return (hidden_states,)
        B, S, H = hidden_states.shape
        x2d = hidden_states.reshape(B * S, H)
        out = _dense_forward(
            x2d, self.weight, self.bias,
            n_valid=self.n_valid, tm=self.tm, tn=self.tn, tk=self.tk,
            out_dtype=hidden_states.dtype,
        )
        return (out.reshape(B, S, self.n_valid),)


# ----------------------------------------------------------------------------
# Demo / self-test
# ----------------------------------------------------------------------------
if __name__ == "__main__":
    key = jax.random.PRNGKey(0)
    k_x, k_w, k_b, k_x2, k_w2, k_b2 = jax.random.split(key, 6)

    batch, seq, hidden = 2, 8, 32
    hidden_states = jax.random.normal(k_x, (batch, seq, hidden), dtype=jnp.float32)
    weight = jax.random.normal(k_w, (hidden, hidden), dtype=jnp.float32) * 0.02
    bias = jax.random.normal(k_b, (1, hidden), dtype=jnp.float32) * 0.01

    # drop=True: must return (hidden_states,) unchanged (no Pallas, no copy).
    pruned = PruneLayerPallas(weight, bias, is_last=False, drop=True)
    (out_drop,) = pruned(hidden_states)
    out_drop = jax.block_until_ready(out_drop)
    assert out_drop.shape == hidden_states.shape
    assert jnp.array_equal(out_drop, hidden_states), "drop path must be identity"

    # drop=False: delegates to wrapped dense layer (Pallas tiled bf16 matmul).
    kept = PruneLayerPallas(weight, bias, is_last=False, drop=False)
    (out_keep,) = kept(hidden_states)
    out_keep = jax.block_until_ready(out_keep)
    xb = hidden_states.reshape(-1, hidden).astype(jnp.bfloat16).astype(jnp.float32)
    wb = weight.astype(jnp.bfloat16).astype(jnp.float32)
    ref = jnp.dot(xb, wb, precision=jax.lax.Precision.HIGHEST) + bias
    assert jnp.allclose(out_keep.reshape(-1, hidden), ref, atol=1e-3, rtol=1e-3), \
        "dense path mismatch"

    # Multi-block grid: M=120 not a multiple of tm (masked edge block),
    # K split into 2 steps (accumulator + bias-once), 3 N tiles.
    B2, S2, K2, N2 = 3, 40, 256, 384
    x2 = jax.random.normal(k_x2, (B2, S2, K2), dtype=jnp.float32)
    w2 = jax.random.normal(k_w2, (K2, N2), dtype=jnp.float32) * 0.02
    b2 = jax.random.normal(k_b2, (1, N2), dtype=jnp.float32) * 0.01
    layer2 = PruneLayerPallas(w2, b2, is_last=True, drop=False, tm=64, tn=128, tk=128)
    (out2,) = layer2(x2)
    out2 = jax.block_until_ready(out2)
    x2b = x2.reshape(-1, K2).astype(jnp.bfloat16).astype(jnp.float32)
    w2b = w2.astype(jnp.bfloat16).astype(jnp.float32)
    ref2 = jnp.dot(x2b, w2b, precision=jax.lax.Precision.HIGHEST) + b2
    assert jnp.allclose(out2.reshape(-1, N2), ref2, atol=1e-3, rtol=1e-3), \
        "tiled matmul mismatch"

    print("KERNEL_OK")
</pallas_src>

<mosaic_0001>
module attributes {stable_mosaic.version = 11 : i64} {
  func.func @_dense_kernel_single_k(%arg0: i32, %arg1: i32, %arg2: i32, %arg3: memref<16x128xbf16, #tpu.memory_space<vmem>>, %arg4: memref<128x128xbf16, #tpu.memory_space<vmem>>, %arg5: memref<1x128xf32, #tpu.memory_space<vmem>>, %arg6: memref<16x128xf32, #tpu.memory_space<vmem>>) attributes {dimension_semantics = [#tpu.dimension_semantics<parallel>, #tpu.dimension_semantics<parallel>, #tpu.dimension_semantics<arbitrary>], iteration_bounds = array<i64: 1, 1, 1>, scalar_prefetch = 0 : i64, scratch_operands = 0 : i64, tpu.core_type = #tpu.core_type<tc>, window_params = [{transform_indices = @transform_0, window_bounds = array<i64: 16, 128>}, {transform_indices = @transform_1, window_bounds = array<i64: 128, 128>}, {transform_indices = @transform_2, window_bounds = array<i64: 1, 128>}, {transform_indices = @transform_3, window_bounds = array<i64: 16, 128>}]} {
    %c0 = arith.constant 0 : index
    %c0_0 = arith.constant 0 : index
    %0 = vector.load %arg3[%c0, %c0_0] : memref<16x128xbf16, #tpu.memory_space<vmem>>, vector<16x128xbf16>
    %c0_1 = arith.constant 0 : index
    %c0_2 = arith.constant 0 : index
    %1 = vector.load %arg4[%c0_1, %c0_2] : memref<128x128xbf16, #tpu.memory_space<vmem>>, vector<128x128xbf16>
    %cst = arith.constant dense<0.000000e+00> : vector<16x128xf32>
    %2 = tpu.matmul %0, %1, %cst {dimension_numbers = #tpu.dot_dimension_numbers<[1], [0], [0], [1], [0, 0, 1, 1], [], []>} : vector<16x128xbf16>, vector<128x128xbf16>, vector<16x128xf32> -> vector<16x128xf32>
    %c0_3 = arith.constant 0 : index
    %c0_4 = arith.constant 0 : index
    %3 = vector.load %arg5[%c0_3, %c0_4] : memref<1x128xf32, #tpu.memory_space<vmem>>, vector<1x128xf32>
    %4 = vector.broadcast %3 : vector<1x128xf32> to vector<16x128xf32>
    %5 = arith.addf %2, %4 : vector<16x128xf32>
    %c0_5 = arith.constant 0 : index
    %c0_6 = arith.constant 0 : index
    %6 = vector.load %arg6[%c0_5, %c0_6] : memref<16x128xf32, #tpu.memory_space<vmem>>, vector<16x128xf32>
    tpu.vector_store %arg6[%c0_5, %c0_6], %5 {strides = array<i32>} : memref<16x128xf32, #tpu.memory_space<vmem>>, vector<16x128xf32>,
    return
  }
  func.func @transform_0(%arg0: i32, %arg1: i32, %arg2: i32) -> (i32, i32) {
    %c0_i32 = arith.constant 0 : i32
    return %arg0, %arg2 : i32, i32
  }
  func.func @transform_1(%arg0: i32, %arg1: i32, %arg2: i32) -> (i32, i32) {
    %c0_i32 = arith.constant 0 : i32
    return %arg2, %arg1 : i32, i32
  }
  func.func @transform_2(%arg0: i32, %arg1: i32, %arg2: i32) -> (i32, i32) {
    %c0_i32 = arith.constant 0 : i32
    %c0_i32_0 = arith.constant 0 : i32
    return %c0_i32, %arg1 : i32, i32
  }
  func.func @transform_3(%arg0: i32, %arg1: i32, %arg2: i32) -> (i32, i32) {
    %c0_i32 = arith.constant 0 : i32
    return %arg0, %arg1 : i32, i32
  }
}

</mosaic_0001>

<llo_original>
// kernel: _dense_forward.1
$region0: #{_dense_forward.1}
  #allocation0 [shape = 'u32[]', space=smem, size = 0x4, offset = 0x4, fixed_abs, tag = 'smem constant byte address 0x4 - core index']
  #allocation1 [shape = 'u32[144,128]{1,0:T(1,128)}', space=vmem, size = 0x12000, scoped, tag = 'internal scratch']
  %s0 = inlined_call_operand.vmem [shape: bf16[16,128], index: 0, kind: input, shape index: {}]
  %s1 = inlined_call_operand.hbm [shape: bf16[128,128], index: 1, kind: input, shape index: {}]
  %s2 = inlined_call_operand.vmem [shape: f32[1,128], index: 2, kind: input, shape index: {}]
  %s3 = inlined_call_operand.hbm [shape: f32[16,128], index: 3, kind: output, shape index: {}]
  %s4 = sld [smem:[#allocation0]]
  $region26: #{_dense_forward.1} parent=0
    _
  %s6 = ssub.s32 1, %s4
  %s7 = scalar_select 0, %s6, %s4
  $region1: #{_dense_forward.1} parent=0
    #allocation2 [shape = 'u8[32768]{0}', space=vmem, size = 0x8000, scoped, tag = 'input window, operand 1, single buffered']
    #allocation3 [shape = 's32[1]{0}', space=sflag, size = 0x4, scoped, tag = 'scoped memory for _dense_forward.1']
    #allocation4 [shape = 's32[1]{0}', space=sflag, size = 0x4, scoped, tag = 'scoped memory for _dense_forward.1']
    #allocation5 [shape = 'u8[8192]{0}', space=vmem, size = 0x2000, scoped, tag = 'output window, operand 0, single buffered']
    %8 = vsyncpa [#allocation3], 0
    %9 = vsyncpa [#allocation4], 0
    // Predicated region
    $region2: #{_dense_forward.1} parent=1 // pred_check
      _
    $region3: #{_dense_forward.1} parent=1 // pred_check_branch
      %11 = sbr.rel (0) target = $region5
    $region4: #{_dense_forward.1} parent=1 // pred_region
      _
    $region5: #{_dense_forward.1} parent=1 // pred_fallthru
      _
    // Predicated region
    $region6: #{_dense_forward.1} parent=1 // pred_check
      _
    $region7: #{_dense_forward.1} parent=1 // pred_check_branch
      %13 = sbr.rel (0) target = $region9
    $region8: #{_dense_forward.1} parent=1 // pred_region
      %s15 = ssub.s32 1024, 1024
      %16 = vsyncadd [#allocation3], %s15
      %s17 = sshll.u32 [#allocation2], 4
      %s18 = int_to_ptr.vmem [resolvable:$true] %s17
      %23 = dma.hbm_to_vmem [thread:$0]  %s1, 1024, %s18, [#allocation3], 64, 64, 4
    $region9: #{_dense_forward.1} parent=1 // pred_fallthru
      _
    // Predicated region
    $region10: #{_dense_forward.1} parent=1 // pred_check
      _
    $region11: #{_dense_forward.1} parent=1 // pred_check_branch
      %25 = sbr.rel (0) target = $region13
    $region12: #{_dense_forward.1} parent=1 // pred_region
      _
    $region13: #{_dense_forward.1} parent=1 // pred_fallthru
      _
    // Predicated region
    $region14: #{_dense_forward.1} parent=1 // pred_check
      _
    $region15: #{_dense_forward.1} parent=1 // pred_check_branch
      %27 = sbr.rel (0) target = $region17
    $region16: #{_dense_forward.1} parent=1 // pred_region
      %28 = dma.done [#allocation3], 1024
    $region17: #{_dense_forward.1} parent=1 // pred_fallthru
      _
    %v30 = vld [vmem:[%s0] sm:$0xf]
    %v31 = vld [vmem:[%s0 + $0x4] sm:$0xf]
    %v32 = vld [vmem:[#allocation2] sm:$0xf]
    %v33 = vld [vmem:[#allocation2 + $0x4] sm:$0xf]
    %v34 = vld [vmem:[#allocation2 + $0x8] sm:$0xf]
    %v35 = vld [vmem:[#allocation2 + $0xc] sm:$0xf]
    %v36 = vld [vmem:[#allocation2 + $0x10] sm:$0xf]
    %v37 = vld [vmem:[#allocation2 + $0x14] sm:$0xf]
    %v38 = vld [vmem:[#allocation2 + $0x18] sm:$0xf]
    %v39 = vld [vmem:[#allocation2 + $0x1c] sm:$0xf]
    %v40 = vld [vmem:[#allocation2 + $0x20] sm:$0xf]
    %v41 = vld [vmem:[#allocation2 + $0x24] sm:$0xf]
    %v42 = vld [vmem:[#allocation2 + $0x28] sm:$0xf]
    %v43 = vld [vmem:[#allocation2 + $0x2c] sm:$0xf]
    %v44 = vld [vmem:[#allocation2 + $0x30] sm:$0xf]
    %v45 = vld [vmem:[#allocation2 + $0x34] sm:$0xf]
    %v46 = vld [vmem:[#allocation2 + $0x38] sm:$0xf]
    %v47 = vld [vmem:[#allocation2 + $0x3c] sm:$0xf]
    %v48 = vld [vmem:[%s2] sm:$0x1]
    %v50 = vlaneseq
    %v51 = vshrl.u32 %v50, 7
    %v52 = vsub.s32 0, %v51
    %v53 = vrot.slane %v48, %v52
    %v57 = vunpack.c.l.b16 %v30
    %v58 = vunpack.c.l.b16 %v31
    %v59 = vpack.c.b16 %v58, %v57
    %v77 = vunpack.c.l.b16 %v32
    %v78 = vunpack.c.l.b16 %v33
    %v79 = vunpack.c.l.b16 %v34
    %v80 = vunpack.c.l.b16 %v35
    %v81 = vunpack.c.l.b16 %v36
    %v82 = vunpack.c.l.b16 %v37
    %v83 = vunpack.c.l.b16 %v38
    %v84 = vunpack.c.l.b16 %v39
    %v85 = vunpack.c.l.b16 %v40
    %v86 = vunpack.c.l.b16 %v41
    %v87 = vunpack.c.l.b16 %v42
    %v88 = vunpack.c.l.b16 %v43
    %v89 = vunpack.c.l.b16 %v44
    %v90 = vunpack.c.l.b16 %v45
    %v91 = vunpack.c.l.b16 %v46
    %v92 = vunpack.c.l.b16 %v47
    %v93 = vpack.c.b16 %v78, %v77
    %v94 = vpack.c.b16 %v80, %v79
    %v95 = vpack.c.b16 %v82, %v81
    %v96 = vpack.c.b16 %v84, %v83
    %v97 = vpack.c.b16 %v86, %v85
    %v98 = vpack.c.b16 %v88, %v87
    %v99 = vpack.c.b16 %v90, %v89
    %v100 = vpack.c.b16 %v92, %v91
    %109 = vmatprep.subr.bf16.mxu0 0
    %110 = vmatpush1.bf16.msra.mxu0 %v100
    %111 = vmatprep.subr.bf16.mxu0 0
    %112 = vmatpush1.bf16.msra.mxu0 %v99
    %113 = vmatprep.subr.bf16.mxu0 0
    %114 = vmatpush1.bf16.msra.mxu0 %v98
    %115 = vmatprep.subr.bf16.mxu0 0
    %116 = vmatpush1.bf16.msra.mxu0 %v97
    %117 = vmatprep.subr.bf16.mxu0 0
    %118 = vmatpush1.bf16.msra.mxu0 %v96
    %119 = vmatprep.subr.bf16.mxu0 0
    %120 = vmatpush1.bf16.msra.mxu0 %v95
    %121 = vmatprep.subr.bf16.mxu0 0
    %122 = vmatpush1.bf16.msra.mxu0 %v94
    %123 = vmatprep.subr.bf16.mxu0 0
    %124 = vmatpush1.bf16.msra.mxu0 %v93
    %125 = vmatprep.subr.bf16.mxu0 0
    %126 = vmatpush2.bf16.msra.mxu0 0
    %127 = vmatprep.subr.bf16.mxu0 0
    %128 = vmatpush2.bf16.msra.mxu0 0
    %129 = vmatprep.subr.bf16.mxu0 0
    %130 = vmatpush2.bf16.msra.mxu0 0
    %131 = vmatprep.subr.bf16.mxu0 0
    %132 = vmatpush2.bf16.msra.mxu0 0
    %133 = vmatprep.subr.bf16.mxu0 0
    %134 = vmatpush2.bf16.msra.mxu0 0
    %135 = vmatprep.subr.bf16.mxu0 0
    %136 = vmatpush2.bf16.msra.mxu0 0
    %137 = vmatprep.subr.bf16.mxu0 0
    %138 = vmatpush2.bf16.msra.mxu0 0
    %139 = vmatprep.subr.bf16.mxu0 0
    %140 = vmatpush2.bf16.msra.mxu0 0
    %141 = vmatprep.mubr.bf16.mxu0 0
    %142 = vmatmul.mubr.bf16.gmra.mxu0 %v59
    %v143 = vpop.f32.mrf.mxu0
    %v144 = vadd.f32 %v53, %v143
    %v145 = vpop.f32.mrf.mxu0
    %v146 = vpop.f32.mrf.mxu0
    %v147 = vadd.f32 %v53, %v146
    %v148 = vpop.f32.mrf.mxu0
    %149 = vdwg.mxu0
    %150 = vst [vmem:[#allocation5] sm:$0xff] %v144
    %151 = vst [vmem:[#allocation5 + $0x8] sm:$0xff] %v147
    // Predicated region
    $region18: #{_dense_forward.1} parent=1 // pred_check
      _
    $region19: #{_dense_forward.1} parent=1 // pred_check_branch
      %153 = sbr.rel (0) target = $region21
    $region20: #{_dense_forward.1} parent=1 // pred_region
      %s155 = ssub.s32 256, 256
      %156 = vsyncadd [#allocation4], %s155
      %s157 = sshll.u32 [#allocation5], 4
      %s158 = int_to_ptr.vmem [resolvable:$true] %s157
      %163 = dma.vmem_to_hbm [thread:$0]  %s158, 256, %s3, [#allocation4], 128, 128, 8
    $region21: #{_dense_forward.1} parent=1 // pred_fallthru
      _
    // Predicated region
    $region22: #{_dense_forward.1} parent=1 // pred_check
      _
    $region23: #{_dense_forward.1} parent=1 // pred_check_branch
      %165 = sbr.rel (0) target = $region25
    $region24: #{_dense_forward.1} parent=1 // pred_region
      %166 = dma.done [#allocation4], 256
    $region25: #{_dense_forward.1} parent=1 // pred_fallthru
      _
    %167 = vsyncpa [#allocation3], 1
    %168 = vsyncpa [#allocation4], 1

</llo_original>
